<compile_context>
chip_gen: v7x
topology: tpu7x:2x2x1
jax: 0.10.0
libtpu: 0.0.40
codegen_flags: <defaults>
</compile_context>

<pallas_src>
import numpy as np
import jax
import jax.numpy as jnp
from jax import lax
from jax.experimental import pallas as pl
from jax.experimental.pallas import tpu as pltpu


def _round_up(x, m):
    return (x + m - 1) // m * m


class HighPassPallas:
    """JAX/Pallas port of the PyTorch HighPass module (deterministic buffers)."""

    def __init__(self, nfft=1024, hop=256,
                 ratio=(1 / 6, 1 / 3, 1 / 2, 2 / 3, 3 / 4, 4 / 5, 5 / 6, 1 / 1)):
        assert nfft % 128 == 0, "nfft must be a multiple of 128 (TPU lane width)"
        assert nfft % hop == 0 and hop < nfft, "nfft must be a multiple of hop"
        self.nfft = nfft
        self.hop = hop
        self.ncol = nfft // hop          # frames per chunk-row (4 for defaults)
        self.n_halo = self.ncol - 1      # chunk rows of halo per frame tile
        self.n_ratio = len(ratio)
        F = nfft // 2 + 1
        self.F = F

        n = np.arange(nfft)
        # torch.hann_window default: periodic hann
        window64 = 0.5 - 0.5 * np.cos(2.0 * np.pi * n / nfft)
        self.window = window64.astype(np.float32)

        # HIGH-pass masks: zero bins BELOW the cutoff (matches the PyTorch spec).
        filt = np.ones((len(ratio), F), dtype=np.float32)
        for i, r in enumerate(ratio):
            filt[i, :int(F * r)] = 0.0
        self.filters = filt

        # rDFT / inverse-rDFT bases (float64 for accurate fusion).
        k = np.arange(F)
        ang = 2.0 * np.pi * np.outer(n, k) / nfft            # (nfft, F)
        C = np.cos(ang)                                       # Re rfft basis
        Sneg = -np.sin(ang)                                   # Im rfft basis
        wk = np.where((k == 0) | (k == nfft // 2), 1.0, 2.0) / nfft
        IC = np.cos(ang).T * wk[:, None]                      # (F, nfft)
        IS = -np.sin(ang).T * wk[:, None]                     # (F, nfft)

        # Fused per-ratio matrices: frames @ M_r == w * irfft(mask_r * rfft(w*frames))
        Ms = np.empty((len(ratio), nfft, nfft), dtype=np.float32)
        for i in range(len(ratio)):
            m = filt[i].astype(np.float64)
            K = (C * m[None, :]) @ IC + (Sneg * m[None, :]) @ IS   # (nfft, nfft)
            Ms[i] = (window64[:, None] * K * window64[None, :]).astype(np.float32)
        # bf16 storage / MXU inputs, f32 accumulation inside the kernel.
        self.M = jnp.asarray(Ms).astype(jnp.bfloat16)          # (n_ratio, nfft, nfft)

    def __call__(self, x, r):
        if x.ndim == 1:
            x = x[None, :]
        x = x.astype(jnp.float32)
        B, T = x.shape
        nfft, hop = self.nfft, self.hop
        ncol, n_halo = self.ncol, self.n_halo

        # F.pad(x, (0, nfft)) : constant zero pad on the right
        x = jnp.pad(x, ((0, 0), (0, nfft)))
        L = x.shape[1]
        n_frames = 1 + L // hop

        # torch.stft(center=True, pad_mode='reflect') padding
        xp = jnp.pad(x, ((0, 0), (nfft // 2, nfft // 2)), mode="reflect")

        # Frame-tile geometry (TF multiple of 16 for bf16 sublane packing).
        TF = min(512, _round_up(n_frames + n_halo, 16))
        Frp = _round_up(n_frames + n_halo, TF)      # >= n_frames + n_halo
        n_tiles = Frp // TF
        n_chunks = Frp + n_halo

        # Chunked audio: chunk[c] = xp[c*hop : (c+1)*hop]; fused framing reads
        # each chunk exactly once instead of the 4x-duplicated frames array.
        xp = jnp.pad(xp, ((0, 0), (0, n_chunks * hop - xp.shape[1])))
        chunks = xp.reshape(B, n_chunks, hop).astype(jnp.bfloat16)

        # Tiny per-tile halo rows: chunks[(f+1)*TF : (f+1)*TF + n_halo]
        hidx = (jnp.arange(n_tiles)[:, None] + 1) * TF + jnp.arange(n_halo)[None, :]
        halos = chunks[:, hidx, :]                      # (B, n_tiles, n_halo, hop)

        # Clamp ratio indices (bounds are otherwise only DMA-checked).
        r = jnp.clip(jnp.asarray(r, dtype=jnp.int32), 0, self.n_ratio - 1)

        def kernel(r_ref, chunks_ref, halo_ref, m_ref, o_ref, frames_ref):
            del r_ref
            f = pl.program_id(1)
            # --- fused framing: frames[t, j*hop:(j+1)*hop] = chunk row (t + j)
            for j in range(ncol):
                if j == 0:
                    frames_ref[:, 0:hop] = chunks_ref[0]
                else:
                    frames_ref[0:TF - j, j * hop:(j + 1) * hop] = chunks_ref[0, j:TF, :]
                    frames_ref[TF - j:TF, j * hop:(j + 1) * hop] = halo_ref[0, 0, 0:j, :]
            # Zero frames past n_frames so the fused overlap-add stays exact.
            fr_raw = frames_ref[...]
            fidx = f * TF + lax.broadcasted_iota(jnp.int32, (TF, 1), 0)
            fr = jnp.where(fidx < n_frames, fr_raw, jnp.zeros_like(fr_raw))
            # --- masked-DFT matmul (bf16 in, f32 acc) + fused overlap-add fold
            #     span[t + j, :] += (fr @ M)[t, j*hop:(j+1)*hop]
            for j in range(ncol):
                yj = jnp.dot(fr, m_ref[0, :, j * hop:(j + 1) * hop],
                             preferred_element_type=jnp.float32)       # (TF, hop)
                if j == 0:
                    o_ref[0, 0, 0:TF, :] = yj
                    o_ref[0, 0, TF:TF + n_halo, :] = jnp.zeros((n_halo, hop),
                                                               jnp.float32)
                else:
                    o_ref[0, 0, j:j + TF, :] = o_ref[0, 0, j:j + TF, :] + yj

        spans = pl.pallas_call(
            kernel,
            out_shape=jax.ShapeDtypeStruct((B, n_tiles, TF + n_halo, hop),
                                           jnp.float32),
            grid_spec=pltpu.PrefetchScalarGridSpec(
                num_scalar_prefetch=1,
                grid=(B, n_tiles),
                in_specs=[
                    # non-overlapping chunk block of the audio
                    pl.BlockSpec((1, TF, hop), lambda b, f, r_ref: (b, f, 0)),
                    # 3-row chunk halo for the tile's last frames
                    pl.BlockSpec((1, 1, n_halo, hop),
                                 lambda b, f, r_ref: (b, f, 0, 0)),
                    # per-batch fused filter matrix (scalar prefetch selects it;
                    # block index constant along the inner axis => one DMA/batch)
                    pl.BlockSpec((1, nfft, nfft),
                                 lambda b, f, r_ref: (r_ref[b], 0, 0)),
                ],
                out_specs=pl.BlockSpec((1, 1, TF + n_halo, hop),
                                       lambda b, f, r_ref: (b, f, 0, 0)),
                scratch_shapes=[pltpu.VMEM((TF, nfft), jnp.bfloat16)],
            ),
            compiler_params=pltpu.CompilerParams(
                dimension_semantics=("parallel", "parallel"),
                vmem_limit_bytes=48 * 1024 * 1024),
        )(r, chunks, halos, self.M)

        # --- stitch the 3-row tile-boundary halos and finish istft in JAX.
        # TODO(synk): cross-tile halo stitch + window-envelope division kept in
        # JAX (tiny compared to the kernel traffic).
        main = spans[:, :, :TF, :]                                  # (B, nt, TF, hop)
        halo = spans[:, :, TF:, :]                                  # (B, nt, 3, hop)
        halo = jnp.pad(halo, ((0, 0), (1, 0), (0, 0), (0, 0)))[:, :n_tiles]
        main = main.at[:, :, :n_halo, :].add(halo)
        ola = main.reshape(B, Frp * hop)

        out_len = hop * (n_frames + n_halo)       # == nfft + hop*(n_frames-1)
        # Window-square envelope (static per n_frames; built on host).
        w2 = (self.window.astype(np.float64) ** 2).reshape(ncol, hop)
        wsq_np = np.zeros((n_frames + n_halo, hop), dtype=np.float64)
        for j in range(ncol):
            wsq_np[j:j + n_frames] += w2[j]
        wsq = jnp.asarray(wsq_np.reshape(-1).astype(np.float32))

        y = ola[:, nfft // 2: out_len - nfft // 2] / wsq[nfft // 2: out_len - nfft // 2]
        return y[:, :T]


def _highpass_reference(hp, x, r):
    """Pure-JAX reference using jnp.fft (mirrors torch.stft/istft semantics)."""
    if x.ndim == 1:
        x = x[None, :]
    x = x.astype(jnp.float32)
    B, T = x.shape
    nfft, hop = hp.nfft, hp.hop
    x = jnp.pad(x, ((0, 0), (0, nfft)))
    L = x.shape[1]
    n_frames = 1 + L // hop
    xp = jnp.pad(x, ((0, 0), (nfft // 2, nfft // 2)), mode="reflect")
    idx = jnp.arange(n_frames)[:, None] * hop + jnp.arange(nfft)[None, :]
    w = jnp.asarray(hp.window)
    frames = xp[:, idx] * w
    spec = jnp.fft.rfft(frames, axis=-1)
    spec = spec * jnp.asarray(hp.filters)[r][:, None, :]
    yfr = jnp.fft.irfft(spec, n=nfft, axis=-1) * w
    out_len = nfft + hop * (n_frames - 1)
    flat_idx = idx.reshape(-1)
    ola = jnp.zeros((B, out_len), jnp.float32).at[:, flat_idx].add(yfr.reshape(B, -1))
    wsq = jnp.zeros((out_len,), jnp.float32).at[flat_idx].add(
        jnp.broadcast_to(w ** 2, (n_frames, nfft)).reshape(-1))
    y = ola[:, nfft // 2: out_len - nfft // 2] / wsq[nfft // 2: out_len - nfft // 2]
    return y[:, :T]


if __name__ == "__main__":
    # Small shapes consistent with the module: nfft=256, hop=64, B=2, T=512.
    nfft, hop = 256, 64
    B, T = 2, 512
    hp = HighPassPallas(nfft=nfft, hop=hop)

    key = jax.random.PRNGKey(0)
    x = jax.random.normal(key, (B, T), dtype=jnp.float32)
    r = jnp.array([2, 5], dtype=jnp.int32)          # per-batch ratio index

    y = jax.block_until_ready(hp(x, r))
    assert y.shape == (B, T) and y.dtype == jnp.float32

    y_ref = jax.block_until_ready(_highpass_reference(hp, x, r))
    np.testing.assert_allclose(np.asarray(y), np.asarray(y_ref), atol=3e-2, rtol=0)

    print("KERNEL_OK")
</pallas_src>

<mosaic_0001>
module attributes {stable_mosaic.version = 11 : i64} {
  func.func @kernel(%arg0: i32, %arg1: i32, %arg2: memref<2xi32, #tpu.memory_space<smem>>, %arg3: memref<1x16x64xbf16, #tpu.memory_space<vmem>>, %arg4: memref<1x1x3x64xbf16, #tpu.memory_space<vmem>>, %arg5: memref<1x256x256xbf16, #tpu.memory_space<vmem>>, %arg6: memref<1x1x19x64xf32, #tpu.memory_space<vmem>>, %arg7: memref<16x256xbf16, #tpu.memory_space<vmem>>) attributes {dimension_semantics = [#tpu.dimension_semantics<parallel>, #tpu.dimension_semantics<parallel>], iteration_bounds = array<i64: 2, 1>, scalar_prefetch = 1 : i64, scratch_operands = 1 : i64, tpu.core_type = #tpu.core_type<tc>, window_params = [{transform_indices = @transform_0, window_bounds = array<i64: 1, 16, 64>}, {transform_indices = @transform_1, window_bounds = array<i64: 1, 1, 3, 64>}, {transform_indices = @transform_2, window_bounds = array<i64: 1, 256, 256>}, {transform_indices = @transform_3, window_bounds = array<i64: 1, 1, 19, 64>}]} {
    %c0 = arith.constant 0 : index
    %c0_0 = arith.constant 0 : index
    %c0_1 = arith.constant 0 : index
    %0 = vector.load %arg3[%c0, %c0_0, %c0_1] : memref<1x16x64xbf16, #tpu.memory_space<vmem>>, vector<1x16x64xbf16>
    %1 = vector.shape_cast %0 : vector<1x16x64xbf16> to vector<16x64xbf16>
    %c0_2 = arith.constant 0 : index
    %c0_3 = arith.constant 0 : index
    %2 = vector.load %arg7[%c0_2, %c0_3] : memref<16x256xbf16, #tpu.memory_space<vmem>>, vector<16x64xbf16>
    tpu.vector_store %arg7[%c0_2, %c0_3], %1 {strides = array<i32>} : memref<16x256xbf16, #tpu.memory_space<vmem>>, vector<16x64xbf16>,
    %c0_4 = arith.constant 0 : index
    %c1 = arith.constant 1 : index
    %c0_5 = arith.constant 0 : index
    %3 = vector.load %arg3[%c0_4, %c1, %c0_5] : memref<1x16x64xbf16, #tpu.memory_space<vmem>>, vector<1x15x64xbf16>
    %4 = vector.shape_cast %3 : vector<1x15x64xbf16> to vector<15x64xbf16>
    %c0_6 = arith.constant 0 : index
    %c64 = arith.constant 64 : index
    %5 = vector.load %arg7[%c0_6, %c64] : memref<16x256xbf16, #tpu.memory_space<vmem>>, vector<15x64xbf16>
    tpu.vector_store %arg7[%c0_6, %c64], %4 {strides = array<i32>} : memref<16x256xbf16, #tpu.memory_space<vmem>>, vector<15x64xbf16>,
    %c0_7 = arith.constant 0 : index
    %c0_8 = arith.constant 0 : index
    %c0_9 = arith.constant 0 : index
    %c0_10 = arith.constant 0 : index
    %6 = vector.load %arg4[%c0_7, %c0_8, %c0_9, %c0_10] : memref<1x1x3x64xbf16, #tpu.memory_space<vmem>>, vector<1x1x1x64xbf16>
    %7 = vector.shape_cast %6 : vector<1x1x1x64xbf16> to vector<1x64xbf16>
    %c15 = arith.constant 15 : index
    %c64_11 = arith.constant 64 : index
    %8 = vector.load %arg7[%c15, %c64_11] : memref<16x256xbf16, #tpu.memory_space<vmem>>, vector<1x64xbf16>
    tpu.vector_store %arg7[%c15, %c64_11], %7 {strides = array<i32>} : memref<16x256xbf16, #tpu.memory_space<vmem>>, vector<1x64xbf16>,
    %c0_12 = arith.constant 0 : index
    %c2 = arith.constant 2 : index
    %c0_13 = arith.constant 0 : index
    %9 = vector.load %arg3[%c0_12, %c2, %c0_13] : memref<1x16x64xbf16, #tpu.memory_space<vmem>>, vector<1x14x64xbf16>
    %10 = vector.shape_cast %9 : vector<1x14x64xbf16> to vector<14x64xbf16>
    %c0_14 = arith.constant 0 : index
    %c128 = arith.constant 128 : index
    %11 = vector.load %arg7[%c0_14, %c128] : memref<16x256xbf16, #tpu.memory_space<vmem>>, vector<14x64xbf16>
    tpu.vector_store %arg7[%c0_14, %c128], %10 {strides = array<i32>} : memref<16x256xbf16, #tpu.memory_space<vmem>>, vector<14x64xbf16>,
    %c0_15 = arith.constant 0 : index
    %c0_16 = arith.constant 0 : index
    %c0_17 = arith.constant 0 : index
    %c0_18 = arith.constant 0 : index
    %12 = vector.load %arg4[%c0_15, %c0_16, %c0_17, %c0_18] : memref<1x1x3x64xbf16, #tpu.memory_space<vmem>>, vector<1x1x2x64xbf16>
    %13 = vector.shape_cast %12 : vector<1x1x2x64xbf16> to vector<2x64xbf16>
    %c14 = arith.constant 14 : index
    %c128_19 = arith.constant 128 : index
    %14 = vector.load %arg7[%c14, %c128_19] : memref<16x256xbf16, #tpu.memory_space<vmem>>, vector<2x64xbf16>
    tpu.vector_store %arg7[%c14, %c128_19], %13 {strides = array<i32>} : memref<16x256xbf16, #tpu.memory_space<vmem>>, vector<2x64xbf16>,
    %c0_20 = arith.constant 0 : index
    %c3 = arith.constant 3 : index
    %c0_21 = arith.constant 0 : index
    %15 = vector.load %arg3[%c0_20, %c3, %c0_21] : memref<1x16x64xbf16, #tpu.memory_space<vmem>>, vector<1x13x64xbf16>
    %16 = vector.shape_cast %15 : vector<1x13x64xbf16> to vector<13x64xbf16>
    %c0_22 = arith.constant 0 : index
    %c192 = arith.constant 192 : index
    %17 = vector.load %arg7[%c0_22, %c192] : memref<16x256xbf16, #tpu.memory_space<vmem>>, vector<13x64xbf16>
    tpu.vector_store %arg7[%c0_22, %c192], %16 {strides = array<i32>} : memref<16x256xbf16, #tpu.memory_space<vmem>>, vector<13x64xbf16>,
    %c0_23 = arith.constant 0 : index
    %c0_24 = arith.constant 0 : index
    %c0_25 = arith.constant 0 : index
    %c0_26 = arith.constant 0 : index
    %18 = vector.load %arg4[%c0_23, %c0_24, %c0_25, %c0_26] : memref<1x1x3x64xbf16, #tpu.memory_space<vmem>>, vector<1x1x3x64xbf16>
    %19 = vector.shape_cast %18 : vector<1x1x3x64xbf16> to vector<3x64xbf16>
    %c13 = arith.constant 13 : index
    %c192_27 = arith.constant 192 : index
    %20 = vector.load %arg7[%c13, %c192_27] : memref<16x256xbf16, #tpu.memory_space<vmem>>, vector<3x64xbf16>
    tpu.vector_store %arg7[%c13, %c192_27], %19 {strides = array<i32>} : memref<16x256xbf16, #tpu.memory_space<vmem>>, vector<3x64xbf16>,
    %c0_28 = arith.constant 0 : index
    %c0_29 = arith.constant 0 : index
    %21 = vector.load %arg7[%c0_28, %c0_29] : memref<16x256xbf16, #tpu.memory_space<vmem>>, vector<16x256xbf16>
    %c16_i32 = arith.constant 16 : i32
    %22 = arith.muli %arg1, %c16_i32 : i32
    %23 = tpu.iota {dimensions = array<i32: 0>} : vector<16x1xi32>
    %24 = vector.broadcast %22 : i32 to vector<16x1xi32>
    %25 = arith.addi %24, %23 : vector<16x1xi32>
    %c13_i32 = arith.constant 13 : i32
    %26 = vector.broadcast %c13_i32 : i32 to vector<16x1xi32>
    %27 = arith.cmpi slt, %25, %26 : vector<16x1xi32>
    %cst = arith.constant 0.000000e+00 : bf16
    %28 = vector.broadcast %cst : bf16 to vector<16x256xbf16>
    %29 = vector.shape_cast %27 : vector<16x1xi1> to vector<16x1xi1>
    %30 = vector.broadcast %29 : vector<16x1xi1> to vector<16x256xi1>
    %31 = arith.select %30, %21, %28 : vector<16x256xi1>, vector<16x256xbf16>
    %c0_30 = arith.constant 0 : index
    %c0_31 = arith.constant 0 : index
    %c0_32 = arith.constant 0 : index
    %32 = vector.load %arg5[%c0_30, %c0_31, %c0_32] : memref<1x256x256xbf16, #tpu.memory_space<vmem>>, vector<1x256x64xbf16>
    %33 = vector.shape_cast %32 : vector<1x256x64xbf16> to vector<256x64xbf16>
    %cst_33 = arith.constant dense<0.000000e+00> : vector<16x64xf32>
    %34 = tpu.matmul %31, %33, %cst_33 {dimension_numbers = #tpu.dot_dimension_numbers<[1], [0], [0], [1], [0, 0, 1, 1], [], []>} : vector<16x256xbf16>, vector<256x64xbf16>, vector<16x64xf32> -> vector<16x64xf32>
    %c0_34 = arith.constant 0 : index
    %c0_35 = arith.constant 0 : index
    %c0_36 = arith.constant 0 : index
    %c0_37 = arith.constant 0 : index
    %35 = vector.load %arg6[%c0_34, %c0_35, %c0_36, %c0_37] : memref<1x1x19x64xf32, #tpu.memory_space<vmem>>, vector<1x1x16x64xf32>
    %36 = vector.shape_cast %35 : vector<1x1x16x64xf32> to vector<16x64xf32>
    %37 = vector.shape_cast %34 : vector<16x64xf32> to vector<1x1x16x64xf32>
    tpu.vector_store %arg6[%c0_34, %c0_35, %c0_36, %c0_37], %37 {strides = array<i32>} : memref<1x1x19x64xf32, #tpu.memory_space<vmem>>, vector<1x1x16x64xf32>,
    %cst_38 = arith.constant 0.000000e+00 : f32
    %38 = vector.broadcast %cst_38 : f32 to vector<3x64xf32>
    %c0_39 = arith.constant 0 : index
    %c0_40 = arith.constant 0 : index
    %c16 = arith.constant 16 : index
    %c0_41 = arith.constant 0 : index
    %39 = vector.load %arg6[%c0_39, %c0_40, %c16, %c0_41] : memref<1x1x19x64xf32, #tpu.memory_space<vmem>>, vector<1x1x3x64xf32>
    %40 = vector.shape_cast %39 : vector<1x1x3x64xf32> to vector<3x64xf32>
    %41 = vector.shape_cast %38 : vector<3x64xf32> to vector<1x1x3x64xf32>
    tpu.vector_store %arg6[%c0_39, %c0_40, %c16, %c0_41], %41 {strides = array<i32>} : memref<1x1x19x64xf32, #tpu.memory_space<vmem>>, vector<1x1x3x64xf32>,
    %c0_42 = arith.constant 0 : index
    %c0_43 = arith.constant 0 : index
    %c64_44 = arith.constant 64 : index
    %42 = vector.load %arg5[%c0_42, %c0_43, %c64_44] : memref<1x256x256xbf16, #tpu.memory_space<vmem>>, vector<1x256x64xbf16>
    %43 = vector.shape_cast %42 : vector<1x256x64xbf16> to vector<256x64xbf16>
    %cst_45 = arith.constant dense<0.000000e+00> : vector<16x64xf32>
    %44 = tpu.matmul %31, %43, %cst_45 {dimension_numbers = #tpu.dot_dimension_numbers<[1], [0], [0], [1], [0, 0, 1, 1], [], []>} : vector<16x256xbf16>, vector<256x64xbf16>, vector<16x64xf32> -> vector<16x64xf32>
    %c0_46 = arith.constant 0 : index
    %c0_47 = arith.constant 0 : index
    %c1_48 = arith.constant 1 : index
    %c0_49 = arith.constant 0 : index
    %45 = vector.load %arg6[%c0_46, %c0_47, %c1_48, %c0_49] : memref<1x1x19x64xf32, #tpu.memory_space<vmem>>, vector<1x1x16x64xf32>
    %46 = vector.shape_cast %45 : vector<1x1x16x64xf32> to vector<16x64xf32>
    %47 = arith.addf %46, %44 : vector<16x64xf32>
    %c0_50 = arith.constant 0 : index
    %c0_51 = arith.constant 0 : index
    %c1_52 = arith.constant 1 : index
    %c0_53 = arith.constant 0 : index
    %48 = vector.load %arg6[%c0_50, %c0_51, %c1_52, %c0_53] : memref<1x1x19x64xf32, #tpu.memory_space<vmem>>, vector<1x1x16x64xf32>
    %49 = vector.shape_cast %48 : vector<1x1x16x64xf32> to vector<16x64xf32>
    %50 = vector.shape_cast %47 : vector<16x64xf32> to vector<1x1x16x64xf32>
    tpu.vector_store %arg6[%c0_50, %c0_51, %c1_52, %c0_53], %50 {strides = array<i32>} : memref<1x1x19x64xf32, #tpu.memory_space<vmem>>, vector<1x1x16x64xf32>,
    %c0_54 = arith.constant 0 : index
    %c0_55 = arith.constant 0 : index
    %c128_56 = arith.constant 128 : index
    %51 = vector.load %arg5[%c0_54, %c0_55, %c128_56] : memref<1x256x256xbf16, #tpu.memory_space<vmem>>, vector<1x256x64xbf16>
    %52 = vector.shape_cast %51 : vector<1x256x64xbf16> to vector<256x64xbf16>
    %cst_57 = arith.constant dense<0.000000e+00> : vector<16x64xf32>
    %53 = tpu.matmul %31, %52, %cst_57 {dimension_numbers = #tpu.dot_dimension_numbers<[1], [0], [0], [1], [0, 0, 1, 1], [], []>} : vector<16x256xbf16>, vector<256x64xbf16>, vector<16x64xf32> -> vector<16x64xf32>
    %c0_58 = arith.constant 0 : index
    %c0_59 = arith.constant 0 : index
    %c2_60 = arith.constant 2 : index
    %c0_61 = arith.constant 0 : index
    %54 = vector.load %arg6[%c0_58, %c0_59, %c2_60, %c0_61] : memref<1x1x19x64xf32, #tpu.memory_space<vmem>>, vector<1x1x16x64xf32>
    %55 = vector.shape_cast %54 : vector<1x1x16x64xf32> to vector<16x64xf32>
    %56 = arith.addf %55, %53 : vector<16x64xf32>
    %c0_62 = arith.constant 0 : index
    %c0_63 = arith.constant 0 : index
    %c2_64 = arith.constant 2 : index
    %c0_65 = arith.constant 0 : index
    %57 = vector.load %arg6[%c0_62, %c0_63, %c2_64, %c0_65] : memref<1x1x19x64xf32, #tpu.memory_space<vmem>>, vector<1x1x16x64xf32>
    %58 = vector.shape_cast %57 : vector<1x1x16x64xf32> to vector<16x64xf32>
    %59 = vector.shape_cast %56 : vector<16x64xf32> to vector<1x1x16x64xf32>
    tpu.vector_store %arg6[%c0_62, %c0_63, %c2_64, %c0_65], %59 {strides = array<i32>} : memref<1x1x19x64xf32, #tpu.memory_space<vmem>>, vector<1x1x16x64xf32>,
    %c0_66 = arith.constant 0 : index
    %c0_67 = arith.constant 0 : index
    %c192_68 = arith.constant 192 : index
    %60 = vector.load %arg5[%c0_66, %c0_67, %c192_68] : memref<1x256x256xbf16, #tpu.memory_space<vmem>>, vector<1x256x64xbf16>
    %61 = vector.shape_cast %60 : vector<1x256x64xbf16> to vector<256x64xbf16>
    %cst_69 = arith.constant dense<0.000000e+00> : vector<16x64xf32>
    %62 = tpu.matmul %31, %61, %cst_69 {dimension_numbers = #tpu.dot_dimension_numbers<[1], [0], [0], [1], [0, 0, 1, 1], [], []>} : vector<16x256xbf16>, vector<256x64xbf16>, vector<16x64xf32> -> vector<16x64xf32>
    %c0_70 = arith.constant 0 : index
    %c0_71 = arith.constant 0 : index
    %c3_72 = arith.constant 3 : index
    %c0_73 = arith.constant 0 : index
    %63 = vector.load %arg6[%c0_70, %c0_71, %c3_72, %c0_73] : memref<1x1x19x64xf32, #tpu.memory_space<vmem>>, vector<1x1x16x64xf32>
    %64 = vector.shape_cast %63 : vector<1x1x16x64xf32> to vector<16x64xf32>
    %65 = arith.addf %64, %62 : vector<16x64xf32>
    %c0_74 = arith.constant 0 : index
    %c0_75 = arith.constant 0 : index
    %c3_76 = arith.constant 3 : index
    %c0_77 = arith.constant 0 : index
    %66 = vector.load %arg6[%c0_74, %c0_75, %c3_76, %c0_77] : memref<1x1x19x64xf32, #tpu.memory_space<vmem>>, vector<1x1x16x64xf32>
    %67 = vector.shape_cast %66 : vector<1x1x16x64xf32> to vector<16x64xf32>
    %68 = vector.shape_cast %65 : vector<16x64xf32> to vector<1x1x16x64xf32>
    tpu.vector_store %arg6[%c0_74, %c0_75, %c3_76, %c0_77], %68 {strides = array<i32>} : memref<1x1x19x64xf32, #tpu.memory_space<vmem>>, vector<1x1x16x64xf32>,
    return
  }
  func.func @transform_0(%arg0: i32, %arg1: i32, %arg2: memref<2xi32, #tpu.memory_space<smem>>) -> (i32, i32, i32) {
    %c0_i32 = arith.constant 0 : i32
    %c0_i32_0 = arith.constant 0 : i32
    return %arg0, %arg1, %c0_i32 : i32, i32, i32
  }
  func.func @transform_1(%arg0: i32, %arg1: i32, %arg2: memref<2xi32, #tpu.memory_space<smem>>) -> (i32, i32, i32, i32) {
    %c0_i32 = arith.constant 0 : i32
    %c0_i32_0 = arith.constant 0 : i32
    %c0_i32_1 = arith.constant 0 : i32
    return %arg0, %arg1, %c0_i32, %c0_i32_0 : i32, i32, i32, i32
  }
  func.func @transform_2(%arg0: i32, %arg1: i32, %arg2: memref<2xi32, #tpu.memory_space<smem>>) -> (i32, i32, i32) {
    %0 = arith.index_cast %arg0 : i32 to index
    %1 = memref.load %arg2[%0] : memref<2xi32, #tpu.memory_space<smem>>
    %c0_i32 = arith.constant 0 : i32
    %c0_i32_0 = arith.constant 0 : i32
    %c0_i32_1 = arith.constant 0 : i32
    return %1, %c0_i32, %c0_i32_0 : i32, i32, i32
  }
  func.func @transform_3(%arg0: i32, %arg1: i32, %arg2: memref<2xi32, #tpu.memory_space<smem>>) -> (i32, i32, i32, i32) {
    %c0_i32 = arith.constant 0 : i32
    %c0_i32_0 = arith.constant 0 : i32
    %c0_i32_1 = arith.constant 0 : i32
    return %arg0, %arg1, %c0_i32, %c0_i32_0 : i32, i32, i32, i32
  }
}

</mosaic_0001>

<llo_original>
// kernel: tpu_custom_call.1
$region0: #{tpu_custom_call.1}
  #allocation0 [shape = 'u32[]', space=smem, size = 0x4, offset = 0x4, fixed_abs, tag = 'smem constant byte address 0x4 - core index']
  #allocation1 [shape = 'u32[144,128]{1,0:T(1,128)}', space=vmem, size = 0x12000, scoped, tag = 'internal scratch']
  #allocation2 [shape = 'bf16[16,256]{1,0:T(16,128)(2,1)}', space=vmem, size = 0x2000, scoped, tag = 'scratch operand']
  #allocation3 [shape = 's32[1]{0}', space=sflag, size = 0x4, scoped, tag = 'scoped memory for tpu_custom_call.1']
  #allocation4 [shape = 'u8[512]{0}', space=smem, size = 0x200, scoped, tag = 'prefetched SMEM operand 0']
  %s0 = inlined_call_operand.vmem [shape: s32[2], index: 0, kind: input, shape index: {}]
  %s1 = inlined_call_operand.vmem [shape: bf16[2,19,64], index: 1, kind: input, shape index: {}]
  %s2 = inlined_call_operand.vmem [shape: bf16[2,1,3,64], index: 2, kind: input, shape index: {}]
  %s3 = inlined_call_operand.hbm [shape: bf16[8,256,256], index: 3, kind: input, shape index: {}]
  %s4 = inlined_call_operand.vmem [shape: f32[2,1,19,64], index: 4, kind: output, shape index: {}]
  %s5 = sld [smem:[#allocation0]]
  $region49: #{tpu_custom_call.1} parent=0
    _
  %s7 = ssub.s32 1, %s5
  %s8 = scalar_select 0, %s7, %s5
  %s9 = sshll.u32 %s0, 4
  %s10 = int_to_ptr.vmem [resolvable:$true] %s9
  %12 = dma.vmem_to_smem %s10, 16, [#allocation4], [#allocation3]
  %13 = dma.done [#allocation3], 16
  %14 = sfence
  $region1: #{tpu_custom_call.1} parent=0
    #allocation5 [shape = 'u8[262144]{0}', space=vmem, size = 0x40000, scoped, tag = 'input window, operand 3']
    #allocation6 [shape = 's32[2]{0}', space=sflag, size = 0x8, scoped, tag = 'scoped memory for tpu_custom_call.1']
    %15 = vsyncpa [#allocation6], 0
    %s16 = scalar_lea.sflag [#allocation6], 1
    %17 = vsyncpa %s16, 0
    loop: start=0, step=1, limit=4
    $region2: #{tpu_custom_call.1} parent=1 // loop_pre_header
      _
    $region3: #{tpu_custom_call.1} parent=1 // loop_header
      %s19 = sphi 0, %s23
      %p20 = scmp.ge.s32.totalorder %s19, 4
      %s26 = sphi 0, %s38
      %s27 = sphi 0, %s34
      %s28 = sphi 0, %s26
      %s29 = sphi 0, %s27
      %s30 = sphi 0, %s28
      %s31 = sphi 0, %s29
      %s43 = sphi 0, %s45
      %s46 = sphi 0, %s43
      %s47 = sphi 0, %s46
      %s63 = sphi 0, %s47
      %s71 = sphi 0, %s73
      %s74 = sphi 0, %s71
      %s75 = sphi 0, %s74
      %s91 = sphi 0, %s75
      %s99 = sphi 0, %s101
      %s102 = sphi 0, %s99
      %s103 = sphi 0, %s102
      %s119 = sphi 0, %s103
      %s127 = sphi 0, %s129
      %s130 = sphi 0, %s127
      %s131 = sphi 0, %s130
      %s147 = sphi 0, %s131
    $region4: #{tpu_custom_call.1} parent=1 // loop_header_branch
      %22 = sbr.rel (%p20) target = $region8
    $region5: #{tpu_custom_call.1} parent=1 // loop_body
      %s24 = ssub.s32 %s19, 1
      %s25 = ssub.s32 %s19, 2
      %s32 = sadd.s32 1, %s27
      %p33 = scmp.ge.s32.totalorder %s32, 1
      %s34 = scalar_select %p33, 0, %s32
      %s35 = sadd.s32 1, %s26
      %s36 = scalar_select %p33, %s35, %s26
      %p37 = scmp.ge.s32.totalorder %s36, 2
      %s38 = scalar_select %p37, 0, %s36
      %s39 = ssub.s32 %s26, %s38
      %s40 = ssub.s32 %s27, %s34
      %s41 = sor.u32 %s39, %s40
      %p42 = scmp.eq.s32.totalorder %s41, 0
      %s44 = sadd.s32 %s43, 1
      %s45 = scalar_select %p42, %s43, %s44
      %p48 = pneg %p42
      %p49 = scmp.eq.s32.totalorder %s19, 1
      %p50 = por %p48, %p49
      %p51 = scmp.ne.s32.totalorder %s43, %s46
      %p52 = scmp.eq.s32.totalorder %s19, 0
      %p53 = por %p51, %p52
      %p54 = scmp.ne.s32.totalorder %s43, %s46
      %p55 = scmp.eq.s32.totalorder %s24, 1
      %p56 = por %p54, %p55
      %p57 = scmp.ne.s32.totalorder %s46, %s47
      %p58 = scmp.eq.s32.totalorder %s24, 0
      %p59 = por %p57, %p58
      %p60 = scmp.ne.s32.totalorder %s46, %s47
      %p61 = scmp.eq.s32.totalorder %s25, 1
      %p62 = por %p60, %p61
      %p64 = scmp.ne.s32.totalorder %s47, %s63
      %p65 = scmp.eq.s32.totalorder %s25, 0
      %p66 = por %p64, %p65
      %s67 = ssub.s32 %s26, %s38
      %s68 = ssub.s32 %s27, %s34
      %s69 = sor.u32 %s67, %s68
      %p70 = scmp.eq.s32.totalorder %s69, 0
      %s72 = sadd.s32 %s71, 1
      %s73 = scalar_select %p70, %s71, %s72
      %p76 = pneg %p70
      %p77 = scmp.eq.s32.totalorder %s19, 1
      %p78 = por %p76, %p77
      %p79 = scmp.ne.s32.totalorder %s71, %s74
      %p80 = scmp.eq.s32.totalorder %s19, 0
      %p81 = por %p79, %p80
      %p82 = scmp.ne.s32.totalorder %s71, %s74
      %p83 = scmp.eq.s32.totalorder %s24, 1
      %p84 = por %p82, %p83
      %p85 = scmp.ne.s32.totalorder %s74, %s75
      %p86 = scmp.eq.s32.totalorder %s24, 0
      %p87 = por %p85, %p86
      %p88 = scmp.ne.s32.totalorder %s74, %s75
      %p89 = scmp.eq.s32.totalorder %s25, 1
      %p90 = por %p88, %p89
      %p92 = scmp.ne.s32.totalorder %s75, %s91
      %p93 = scmp.eq.s32.totalorder %s25, 0
      %p94 = por %p92, %p93
      %s95 = sld [smem:[#allocation4 + %s26]]
      %s96 = sld [smem:[#allocation4 + %s38]]
      %s97 = ssub.s32 %s95, %s96
      %p98 = scmp.eq.s32.totalorder %s97, 0
      %s100 = sadd.s32 %s99, 1
      %s101 = scalar_select %p98, %s99, %s100
      %p104 = pneg %p98
      %p105 = scmp.eq.s32.totalorder %s19, 1
      %p106 = por %p104, %p105
      %p107 = scmp.ne.s32.totalorder %s99, %s102
      %p108 = scmp.eq.s32.totalorder %s19, 0
      %p109 = por %p107, %p108
      %p110 = scmp.ne.s32.totalorder %s99, %s102
      %p111 = scmp.eq.s32.totalorder %s24, 1
      %p112 = por %p110, %p111
      %p113 = scmp.ne.s32.totalorder %s102, %s103
      %p114 = scmp.eq.s32.totalorder %s24, 0
      %p115 = por %p113, %p114
      %p116 = scmp.ne.s32.totalorder %s102, %s103
      %p117 = scmp.eq.s32.totalorder %s25, 1
      %p118 = por %p116, %p117
      %p120 = scmp.ne.s32.totalorder %s103, %s119
      %p121 = scmp.eq.s32.totalorder %s25, 0
      %p122 = por %p120, %p121
      %s123 = ssub.s32 %s26, %s38
      %s124 = ssub.s32 %s27, %s34
      %s125 = sor.u32 %s123, %s124
      %p126 = scmp.eq.s32.totalorder %s125, 0
      %s128 = sadd.s32 %s127, 1
      %s129 = scalar_select %p126, %s127, %s128
      %p132 = pneg %p126
      %p133 = scmp.eq.s32.totalorder %s19, 1
      %p134 = por %p132, %p133
      %p135 = scmp.ne.s32.totalorder %s127, %s130
      %p136 = scmp.eq.s32.totalorder %s19, 0
      %p137 = por %p135, %p136
      %p138 = scmp.ne.s32.totalorder %s127, %s130
      %p139 = scmp.eq.s32.totalorder %s24, 1
      %p140 = por %p138, %p139
      %p141 = scmp.ne.s32.totalorder %s130, %s131
      %p142 = scmp.eq.s32.totalorder %s24, 0
      %p143 = por %p141, %p142
      %p144 = scmp.ne.s32.totalorder %s130, %s131
      %p145 = scmp.eq.s32.totalorder %s25, 1
      %p146 = por %p144, %p145
      %p148 = scmp.ne.s32.totalorder %s131, %s147
      %p149 = scmp.eq.s32.totalorder %s25, 0
      %p150 = por %p148, %p149
      %p151 = scmp.le.s32.totalorder 1, %s19
      %p152 = scmp.lt.s32.totalorder %s19, 3
      %p153 = pnand %p151, %p152
      %p154 = pneg %p153
      // Predicated region
      $region9: #{tpu_custom_call.1} parent=5 // pred_check
        _
      $region10: #{tpu_custom_call.1} parent=5 // pred_check_branch
        %156 = sbr.rel (%p153) target = $region12
      $region11: #{tpu_custom_call.1} parent=5 // pred_region
        %s157 = ssub.s32 %s19, 1
      $region12: #{tpu_custom_call.1} parent=5 // pred_fallthru
        _
      %p158 = scmp.lt.s32.totalorder %s19, 2
      // Predicated region
      $region13: #{tpu_custom_call.1} parent=5 // pred_check
        %p159 = pneg %p158
      $region14: #{tpu_custom_call.1} parent=5 // pred_check_branch
        %161 = sbr.rel (%p159) target = $region16
      $region15: #{tpu_custom_call.1} parent=5 // pred_region
        // Predicated region
        $region17: #{tpu_custom_call.1} parent=15 // pred_check
          %p162 = pneg %p53
        $region18: #{tpu_custom_call.1} parent=15 // pred_check_branch
          %164 = sbr.rel (%p162) target = $region20
        $region19: #{tpu_custom_call.1} parent=15 // pred_region
          %s165 = smul.u32 2, %s27
          %s166 = ssub.s32 3, %s165
          %p167 = scmp.lt.s32.totalorder %s166, 2
          %s168 = scalar_select %p167, %s166, 2
          %s169 = smul.u32 64, %s168
          %p170 = scmp.lt.s32.totalorder %s26, 1
          %s171 = scalar_select %p170, %s26, 1
          %p172 = scmp.lt.s32.totalorder %s165, 2
          %s173 = scalar_select %p172, %s165, 2
          %s174 = smul.addr %s171, 3
          %s175 = sadd.s32 %s173, %s174
          %s176 = smul.addr %s175, 4
          %s177 = scalar_lea.vmem %s1, %s176
          %s178 = smul.u32 2, %s27
          %s179 = ssub.s32 3, %s178
          %p180 = scmp.lt.s32.totalorder %s179, 2
          %s181 = scalar_select %p180, %s179, 2
          %s182 = smul.u32 64, %s181
        $region20: #{tpu_custom_call.1} parent=15 // pred_fallthru
          _
        // Predicated region
        $region21: #{tpu_custom_call.1} parent=15 // pred_check
          %p183 = pneg %p81
        $region22: #{tpu_custom_call.1} parent=15 // pred_check_branch
          %185 = sbr.rel (%p183) target = $region24
        $region23: #{tpu_custom_call.1} parent=15 // pred_region
          %p186 = scmp.lt.s32.totalorder %s26, 1
          %s187 = scalar_select %p186, %s26, 1
          %p188 = scmp.lt.s32.totalorder %s27, 0
          %s189 = scalar_select %p188, %s27, 0
          %s190 = sadd.s32 %s189, %s187
          %s191 = smul.addr %s190, 2
          %s192 = scalar_lea.vmem %s2, %s191
        $region24: #{tpu_custom_call.1} parent=15 // pred_fallthru
          _
        // Predicated region
        $region25: #{tpu_custom_call.1} parent=15 // pred_check
          %p193 = pneg %p109
        $region26: #{tpu_custom_call.1} parent=15 // pred_check_branch
          %195 = sbr.rel (%p193) target = $region28
        $region27: #{tpu_custom_call.1} parent=15 // pred_region
          %s196 = sand.u32 %s99, 1
          %s197 = scalar_lea.sflag [#allocation6], %s196
          %s198 = sand.u32 %s99, 1
          %s199 = smul.addr %s198, 256
          %s200 = scalar_lea.vmem [#allocation5], %s199
          %s201 = sld [smem:[#allocation4 + %s26]]
          %s203 = ssub.s32 4096, 4096
          %204 = vsyncadd %s197, %s203
          %s205 = smul.addr %s201, 64
          %s206 = smul.addr %s205, 64
          %s207 = scalar_lea.hbm %s3, %s206
          %s208 = sshll.u32 %s200, 4
          %s209 = int_to_ptr.vmem [resolvable:$true] %s208
          %214 = dma.hbm_to_vmem [thread:$0]  %s207, 4096, %s209, %s197, 128, 128, 8
        $region28: #{tpu_custom_call.1} parent=15 // pred_fallthru
          _
      $region16: #{tpu_custom_call.1} parent=5 // pred_fallthru
        _
      %p215 = scmp.le.s32.totalorder 1, %s19
      %p216 = scmp.lt.s32.totalorder %s19, 3
      %p217 = pnand %p215, %p216
      %p218 = pneg %p217
      // Predicated region
      $region29: #{tpu_custom_call.1} parent=5 // pred_check
        _
      $region30: #{tpu_custom_call.1} parent=5 // pred_check_branch
        %220 = sbr.rel (%p217) target = $region32
      $region31: #{tpu_custom_call.1} parent=5 // pred_region
        %s221 = ssub.s32 %s19, 1
        %s222 = sand.u32 %s102, 1
        %s223 = scalar_lea.sflag [#allocation6], %s222
        %s224 = sand.u32 %s102, 1
        %s225 = smul.addr %s224, 256
        %s226 = scalar_lea.vmem [#allocation5], %s225
        // Predicated region
        $region33: #{tpu_custom_call.1} parent=31 // pred_check
          %p227 = pneg %p115
        $region34: #{tpu_custom_call.1} parent=31 // pred_check_branch
          %229 = sbr.rel (%p227) target = $region36
        $region35: #{tpu_custom_call.1} parent=31 // pred_region
          %230 = dma.done %s223, 4096
        $region36: #{tpu_custom_call.1} parent=31 // pred_fallthru
          _
        %s231 = smul.u32 2, %s29
        %s232 = ssub.s32 3, %s231
        %p233 = scmp.lt.s32.totalorder %s232, 2
        %s234 = scalar_select %p233, %s232, 2
        %s235 = smul.u32 64, %s234
        %p236 = scmp.lt.s32.totalorder %s28, 1
        %s237 = scalar_select %p236, %s28, 1
        %p238 = scmp.lt.s32.totalorder %s231, 2
        %s239 = scalar_select %p238, %s231, 2
        %s240 = smul.addr %s237, 3
        %s241 = sadd.s32 %s239, %s240
        %s242 = smul.addr %s241, 4
        %s243 = scalar_lea.vmem %s1, %s242
        %p244 = pneg %p59
        %p245 = pneg %p56
        %p246 = scmp.lt.s32.totalorder %s28, 1
        %s247 = scalar_select %p246, %s28, 1
        %p248 = scmp.lt.s32.totalorder %s29, 0
        %s249 = scalar_select %p248, %s29, 0
        %s250 = sadd.s32 %s249, %s247
        %s251 = smul.addr %s250, 2
        %s252 = scalar_lea.vmem %s2, %s251
        %p253 = pneg %p87
        %p254 = pneg %p84
        %s255 = sand.u32 %s102, 1
        %s256 = scalar_lea.sflag [#allocation6], %s255
        %s257 = sand.u32 %s102, 1
        %s258 = smul.addr %s257, 256
        %s259 = scalar_lea.vmem [#allocation5], %s258
        %p260 = pneg %p115
        %p261 = pneg %p112
        %p262 = pneg %p143
        %p263 = pneg %p140
        %p264 = scmp.lt.s32.totalorder %s28, 1
        %s265 = scalar_select %p264, %s28, 1
        %p266 = scmp.lt.s32.totalorder %s29, 0
        %s267 = scalar_select %p266, %s29, 0
        %s268 = smul.addr %s267, 3
        %s269 = smul.addr %s265, 3
        %s270 = sadd.s32 %s268, %s269
        %s271 = smul.addr %s270, 8
        %s272 = scalar_lea.vmem %s4, %s271
        %s273 = smul.u32 2, %s29
        %s274 = ssub.s32 3, %s273
        %p275 = scmp.lt.s32.totalorder %s274, 2
        %s276 = scalar_select %p275, %s274, 2
        %s277 = smul.u32 64, %s276
        %p278 = scmp.lt.s32.totalorder %s28, 1
        %s279 = scalar_select %p278, %s28, 1
        %p280 = scmp.lt.s32.totalorder %s273, 2
        %s281 = scalar_select %p280, %s273, 2
        %s282 = smul.addr %s279, 3
        %s283 = sadd.s32 %s281, %s282
        %s284 = smul.addr %s283, 4
        %s285 = scalar_lea.vmem %s1, %s284
        %s286 = smul.u32 2, %s29
        %s287 = ssub.s32 3, %s286
        %p288 = scmp.lt.s32.totalorder %s287, 2
        %s289 = scalar_select %p288, %s287, 2
        %s290 = smul.u32 64, %s289
        %p291 = scmp.lt.s32.totalorder %s28, 1
        %s292 = scalar_select %p291, %s28, 1
        %p293 = scmp.lt.s32.totalorder %s29, 0
        %s294 = scalar_select %p293, %s29, 0
        %s295 = sadd.s32 %s294, %s292
        %s296 = smul.addr %s295, 2
        %s297 = scalar_lea.vmem %s2, %s296
        %s298 = sld [smem:[#allocation4 + %s28]]
        %p299 = scmp.lt.s32.totalorder %s28, 1
        %s300 = scalar_select %p299, %s28, 1
        %p301 = scmp.lt.s32.totalorder %s29, 0
        %s302 = scalar_select %p301, %s29, 0
        %s303 = smul.addr %s302, 3
        %s304 = smul.addr %s300, 3
        %s305 = sadd.s32 %s303, %s304
        %s306 = smul.addr %s305, 8
        %s307 = scalar_lea.vmem %s4, %s306
        %v311 = vld [vmem:[%s285] sm:$0xf]
        %v312 = vld [vmem:[%s285 + $0x4] sm:$0xf]
        %v315 = vunpack.c.l.b16 %v311
        %v316 = vunpack.c.l.b16 %v312
        %v317 = vpack.c.b16 %v316, %v315
        %vm319 = vcmask 523264
        %320 = vst.msk [vmem:[#allocation2] sm:$0xff] %vm319, %v317
        %v321 = vld [vmem:[%s285] sm:$0xf]
        %v322 = vld [vmem:[%s285 + $0x4] sm:$0xf]
        %v325 = vunpack.c.l.b16 %v321
        %v326 = vunpack.c.l.b16 %v322
        %v327 = vpack.c.b16 %v326, %v325
        %v329 = vshrl.u32 %v327, 16
        %v331 = vshll.u32 %v327, 16
        %v333 = vrot.slane %v331, 1
        %v334 = vor.u32 %v329, %v333
        %335 = vrot.lane.b32.xlu0 %v334, 64
        %v336 = vpop.permute.xlu0 %335
        %vm338 = vcmask 1048064
        %vm339 = vsmask.f32 7424
        %vm340 = vmand %vm338, %vm339
        %v341 = vld [vmem:[#allocation2] sm:$0xff]
        %v342 = vsel %vm340, %v336, %v341
        %343 = vst [vmem:[#allocation2] sm:$0xff] %v342
        %v344 = vld [vmem:[%s297] sm:$0x1]
        %v347 = vunpack.c.l.s4 1983009808
        %v348 = vunpack.c.0.s8 %v347
        %v349 = vlaneseq
        %v350 = vshrl.u32 %v349, 7
        %v351 = vsub.s32 %v348, %v350
        %v352 = vrot.slane %v344, %v351
        %v354 = vshll.u32 %v352, 16
        %v356 = vrot.slane %v354, 1
        %357 = vrot.lane.b32.xlu0 %v356, 64
        %v358 = vpop.permute.xlu0 %357
        %vm360 = vcmask 1048071
        %vm361 = vsmask.f32 7966
        %vm362 = vmand %vm360, %vm361
        %v363 = vld [vmem:[#allocation2] sm:$0x80]
        %v364 = vsel %vm362, %v358, %v363
        %365 = vst [vmem:[#allocation2] sm:$0x80] %v364
        %v366 = vld [vmem:[%s285] sm:$0xe]
        %v367 = vld [vmem:[%s285 + $0x4] sm:$0xf]
        %v370 = vunpack.c.l.b16 %v366
        %v371 = vunpack.c.l.b16 %v367
        %v372 = vpack.c.b16 %v371, %v370
        %v373 = vrot.slane %v372, 1
        %vm375 = vcmask 522240
        %376 = vst.msk [vmem:[#allocation2 + $0x8] sm:$0x7f] %vm375, %v373
        %v377 = vld [vmem:[%s297] sm:$0x1]
        %v380 = vunpack.c.l.s4 1983009808
        %v381 = vunpack.c.0.s8 %v380
        %v382 = vlaneseq
        %v383 = vshrl.u32 %v382, 7
        %v384 = vsub.s32 %v381, %v383
        %v385 = vrot.slane %v377, %v384
        %v386 = vrot.slane %v385, 1
        %vm388 = vcmask 523271
        %389 = vst.msk [vmem:[#allocation2 + $0x8] sm:$0x80] %vm388, %v386
        %v390 = vld [vmem:[%s285] sm:$0xe]
        %v391 = vld [vmem:[%s285 + $0x4] sm:$0xf]
        %v394 = vunpack.c.l.b16 %v390
        %v395 = vunpack.c.l.b16 %v391
        %v396 = vpack.c.b16 %v395, %v394
        %v398 = vshrl.u32 %v396, 16
        %v400 = vrot.slane %v398, 1
        %v401 = vshll.u32 %v396, 16
        %v403 = vrot.slane %v401, 2
        %v404 = vor.u32 %v400, %v403
        %405 = vrot.lane.b32.xlu0 %v404, 64
        %v406 = vpop.permute.xlu0 %405
        %vm408 = vcmask 1047040
        %vm409 = vsmask.f32 6400
        %vm410 = vmand %vm408, %vm409
        %v411 = vld [vmem:[#allocation2 + $0x8] sm:$0x7f]
        %v412 = vsel %vm410, %v406, %v411
        %413 = vst [vmem:[#allocation2 + $0x8] sm:$0x7f] %v412
        %v414 = vld [vmem:[%s297] sm:$0x3]
        %v417 = vunpack.c.l.s4 1983009808
        %v418 = vunpack.c.0.s8 %v417
        %v419 = vlaneseq
        %v420 = vshrl.u32 %v419, 7
        %v421 = vsub.s32 %v418, %v420
        %v422 = vrot.slane %v414, %v421
        %v424 = vshrl.u32 %v422, 16
        %v426 = vrot.slane %v424, 1
        %v427 = vshll.u32 %v422, 16
        %v429 = vrot.slane %v427, 2
        %v430 = vor.u32 %v426, %v429
        %431 = vrot.lane.b32.xlu0 %v430, 64
        %v432 = vpop.permute.xlu0 %431
        %vm434 = vcmask 1048070
        %vm435 = vsmask.f32 7962
        %vm436 = vmand %vm434, %vm435
        %v437 = vld [vmem:[#allocation2 + $0x8] sm:$0xc0]
        %v438 = vsel %vm436, %v432, %v437
        %439 = vst [vmem:[#allocation2 + $0x8] sm:$0xc0] %v438
        %v440 = vld [vmem:[#allocation2] sm:$0xff]
        %v441 = vld [vmem:[#allocation2 + $0x8] sm:$0xff]
        %s442 = smul.u32 %s29, 16
        %v443 = vlaneseq
        %v444 = vshrl.u32 %v443, 7
        %v445 = vadd.s32 %v444, 8
        %v446 = vstv %s442
        %v447 = vadd.s32 %v446, %v444
        %v448 = vadd.s32 %v446, %v445
        %vm449 = vcmp.lt.s32.totalorder %v447, 13
        %vm450 = vcmp.lt.s32.totalorder %v448, 13
        %v451 = vsel %vm449, 1, 0
        %v452 = vsel %vm450, 1, 0
        %vm453 = vcmp.eq.s32.totalorder %v451, 1
        %vm454 = vcmp.eq.s32.totalorder %v452, 1
        %vm455 = vmpackc.low %vm453, %vm453
        %vm456 = vmpackc.low %vm454, %vm454
        %v457 = vsel %vm455, 65537, 0
        %v458 = vsel %vm456, 65537, 0
        %v459 = vunpack.c.l.b16 %v457
        %v460 = vunpack.c.l.b16 %v458
        %v461 = vpack.c.b16 %v460, %v459
        %vm462 = vcmp.ne.s16.totalorder %v461, 0
        %v463 = vsel %vm462, %v440, 0
        %v464 = vsel %vm462, %v441, 0
        %v465 = vld [vmem:[%s226] sm:$0xf]
        %v466 = vld [vmem:[%s226 + $0x8] sm:$0xf]
        %v467 = vld [vmem:[%s226 + $0x10] sm:$0xf]
        %v468 = vld [vmem:[%s226 + $0x18] sm:$0xf]
        %v469 = vld [vmem:[%s226 + $0x20] sm:$0xf]
        %v470 = vld [vmem:[%s226 + $0x28] sm:$0xf]
        %v471 = vld [vmem:[%s226 + $0x30] sm:$0xf]
        %v472 = vld [vmem:[%s226 + $0x38] sm:$0xf]
        %v473 = vld [vmem:[%s226 + $0x40] sm:$0xf]
        %v474 = vld [vmem:[%s226 + $0x48] sm:$0xf]
        %v475 = vld [vmem:[%s226 + $0x50] sm:$0xf]
        %v476 = vld [vmem:[%s226 + $0x58] sm:$0xf]
        %v477 = vld [vmem:[%s226 + $0x60] sm:$0xf]
        %v478 = vld [vmem:[%s226 + $0x68] sm:$0xf]
        %v479 = vld [vmem:[%s226 + $0x70] sm:$0xf]
        %v480 = vld [vmem:[%s226 + $0x78] sm:$0xf]
        %v481 = vld [vmem:[%s226 + $0x80] sm:$0xf]
        %v482 = vld [vmem:[%s226 + $0x88] sm:$0xf]
        %v483 = vld [vmem:[%s226 + $0x90] sm:$0xf]
        %v484 = vld [vmem:[%s226 + $0x98] sm:$0xf]
        %v485 = vld [vmem:[%s226 + $0xa0] sm:$0xf]
        %v486 = vld [vmem:[%s226 + $0xa8] sm:$0xf]
        %v487 = vld [vmem:[%s226 + $0xb0] sm:$0xf]
        %v488 = vld [vmem:[%s226 + $0xb8] sm:$0xf]
        %v489 = vld [vmem:[%s226 + $0xc0] sm:$0xf]
        %v490 = vld [vmem:[%s226 + $0xc8] sm:$0xf]
        %v491 = vld [vmem:[%s226 + $0xd0] sm:$0xf]
        %v492 = vld [vmem:[%s226 + $0xd8] sm:$0xf]
        %v493 = vld [vmem:[%s226 + $0xe0] sm:$0xf]
        %v494 = vld [vmem:[%s226 + $0xe8] sm:$0xf]
        %v495 = vld [vmem:[%s226 + $0xf0] sm:$0xf]
        %v496 = vld [vmem:[%s226 + $0xf8] sm:$0xf]
        %v529 = vunpack.c.l.b16 %v465
        %v530 = vunpack.c.l.b16 %v466
        %v531 = vunpack.c.l.b16 %v467
        %v532 = vunpack.c.l.b16 %v468
        %v533 = vunpack.c.l.b16 %v469
        %v534 = vunpack.c.l.b16 %v470
        %v535 = vunpack.c.l.b16 %v471
        %v536 = vunpack.c.l.b16 %v472
        %v537 = vunpack.c.l.b16 %v473
        %v538 = vunpack.c.l.b16 %v474
        %v539 = vunpack.c.l.b16 %v475
        %v540 = vunpack.c.l.b16 %v476
        %v541 = vunpack.c.l.b16 %v477
        %v542 = vunpack.c.l.b16 %v478
        %v543 = vunpack.c.l.b16 %v479
        %v544 = vunpack.c.l.b16 %v480
        %v545 = vunpack.c.l.b16 %v481
        %v546 = vunpack.c.l.b16 %v482
        %v547 = vunpack.c.l.b16 %v483
        %v548 = vunpack.c.l.b16 %v484
        %v549 = vunpack.c.l.b16 %v485
        %v550 = vunpack.c.l.b16 %v486
        %v551 = vunpack.c.l.b16 %v487
        %v552 = vunpack.c.l.b16 %v488
        %v553 = vunpack.c.l.b16 %v489
        %v554 = vunpack.c.l.b16 %v490
        %v555 = vunpack.c.l.b16 %v491
        %v556 = vunpack.c.l.b16 %v492
        %v557 = vunpack.c.l.b16 %v493
        %v558 = vunpack.c.l.b16 %v494
        %v559 = vunpack.c.l.b16 %v495
        %v560 = vunpack.c.l.b16 %v496
        %v561 = vpack.c.b16 %v530, %v529
        %v562 = vpack.c.b16 %v532, %v531
        %v563 = vpack.c.b16 %v534, %v533
        %v564 = vpack.c.b16 %v536, %v535
        %v565 = vpack.c.b16 %v538, %v537
        %v566 = vpack.c.b16 %v540, %v539
        %v567 = vpack.c.b16 %v542, %v541
        %v568 = vpack.c.b16 %v544, %v543
        %v569 = vpack.c.b16 %v546, %v545
        %v570 = vpack.c.b16 %v548, %v547
        %v571 = vpack.c.b16 %v550, %v549
        %v572 = vpack.c.b16 %v552, %v551
        %v573 = vpack.c.b16 %v554, %v553
        %v574 = vpack.c.b16 %v556, %v555
        %v575 = vpack.c.b16 %v558, %v557
        %v576 = vpack.c.b16 %v560, %v559
        %593 = vmatprep.subr.bf16.mxu0 0
        %594 = vmatpush1.bf16.msra.mxu0 %v561
        %595 = vmatprep.subr.bf16.mxu0 0
        %596 = vmatpush1.bf16.msra.mxu0 %v562
        %597 = vmatprep.subr.bf16.mxu0 0
        %598 = vmatpush1.bf16.msra.mxu0 %v563
        %599 = vmatprep.subr.bf16.mxu0 0
        %600 = vmatpush1.bf16.msra.mxu0 %v564
        %601 = vmatprep.subr.bf16.mxu0 0
        %602 = vmatpush1.bf16.msra.mxu0 %v565
        %603 = vmatprep.subr.bf16.mxu0 0
        %604 = vmatpush1.bf16.msra.mxu0 %v566
        %605 = vmatprep.subr.bf16.mxu0 0
        %606 = vmatpush1.bf16.msra.mxu0 %v567
        %607 = vmatprep.subr.bf16.mxu0 0
        %608 = vmatpush1.bf16.msra.mxu0 %v568
        %609 = vmatprep.subr.bf16.mxu0 0
        %610 = vmatpush1.bf16.msra.mxu0 %v569
        %611 = vmatprep.subr.bf16.mxu0 0
        %612 = vmatpush1.bf16.msra.mxu0 %v570
        %613 = vmatprep.subr.bf16.mxu0 0
        %614 = vmatpush1.bf16.msra.mxu0 %v571
        %615 = vmatprep.subr.bf16.mxu0 0
        %616 = vmatpush1.bf16.msra.mxu0 %v572
        %617 = vmatprep.subr.bf16.mxu0 0
        %618 = vmatpush1.bf16.msra.mxu0 %v573
        %619 = vmatprep.subr.bf16.mxu0 0
        %620 = vmatpush1.bf16.msra.mxu0 %v574
        %621 = vmatprep.subr.bf16.mxu0 0
        %622 = vmatpush1.bf16.msra.mxu0 %v575
        %623 = vmatprep.subr.bf16.mxu0 0
        %624 = vmatpush1.bf16.msra.mxu0 %v576
        %625 = vmatprep.mubr.bf16.mxu0 %v464
        %626 = vmatmul.mubr.bf16.gmra.mrb[0].mxu0 %v463
        %v627 = vpop.f32.mrb[0].mxu0
        %v628 = vadd.f32 0.0, %v627
        %v629 = vpop.f32.mrb[0].mxu0
        %v630 = vpop.f32.mrb[0].mxu0
        %v631 = vadd.f32 0.0, %v630
        %v632 = vpop.f32.mrb[0].mxu0
        %633 = vdwg.mxu0
        %634 = vst.msk [vmem:[%s307] sm:$0xff] %vm319, %v628
        %635 = vst.msk [vmem:[%s307 + $0x8] sm:$0xff] %vm319, %v631
        %vm636 = vcmask 518144
        %637 = vst.msk [vmem:[%s307 + $0x10] sm:$0x7] %vm636, 0.0
        %v638 = vld [vmem:[%s226] sm:$0xf]
        %v639 = vld [vmem:[%s226 + $0x8] sm:$0xf]
        %v640 = vld [vmem:[%s226 + $0x10] sm:$0xf]
        %v641 = vld [vmem:[%s226 + $0x18] sm:$0xf]
        %v642 = vld [vmem:[%s226 + $0x20] sm:$0xf]
        %v643 = vld [vmem:[%s226 + $0x28] sm:$0xf]
        %v644 = vld [vmem:[%s226 + $0x30] sm:$0xf]
        %v645 = vld [vmem:[%s226 + $0x38] sm:$0xf]
        %v646 = vld [vmem:[%s226 + $0x40] sm:$0xf]
        %v647 = vld [vmem:[%s226 + $0x48] sm:$0xf]
        %v648 = vld [vmem:[%s226 + $0x50] sm:$0xf]
        %v649 = vld [vmem:[%s226 + $0x58] sm:$0xf]
        %v650 = vld [vmem:[%s226 + $0x60] sm:$0xf]
        %v651 = vld [vmem:[%s226 + $0x68] sm:$0xf]
        %v652 = vld [vmem:[%s226 + $0x70] sm:$0xf]
        %v653 = vld [vmem:[%s226 + $0x78] sm:$0xf]
        %v654 = vld [vmem:[%s226 + $0x80] sm:$0xf]
        %v655 = vld [vmem:[%s226 + $0x88] sm:$0xf]
        %v656 = vld [vmem:[%s226 + $0x90] sm:$0xf]
        %v657 = vld [vmem:[%s226 + $0x98] sm:$0xf]
        %v658 = vld [vmem:[%s226 + $0xa0] sm:$0xf]
        %v659 = vld [vmem:[%s226 + $0xa8] sm:$0xf]
        %v660 = vld [vmem:[%s226 + $0xb0] sm:$0xf]
        %v661 = vld [vmem:[%s226 + $0xb8] sm:$0xf]
        %v662 = vld [vmem:[%s226 + $0xc0] sm:$0xf]
        %v663 = vld [vmem:[%s226 + $0xc8] sm:$0xf]
        %v664 = vld [vmem:[%s226 + $0xd0] sm:$0xf]
        %v665 = vld [vmem:[%s226 + $0xd8] sm:$0xf]
        %v666 = vld [vmem:[%s226 + $0xe0] sm:$0xf]
        %v667 = vld [vmem:[%s226 + $0xe8] sm:$0xf]
        %v668 = vld [vmem:[%s226 + $0xf0] sm:$0xf]
        %v669 = vld [vmem:[%s226 + $0xf8] sm:$0xf]
        %v702 = vunpack.c.l.b16 %v638
        %v703 = vunpack.c.l.b16 %v639
        %v704 = vunpack.c.l.b16 %v640
        %v705 = vunpack.c.l.b16 %v641
        %v706 = vunpack.c.l.b16 %v642
        %v707 = vunpack.c.l.b16 %v643
        %v708 = vunpack.c.l.b16 %v644
        %v709 = vunpack.c.l.b16 %v645
        %v710 = vunpack.c.l.b16 %v646
        %v711 = vunpack.c.l.b16 %v647
        %v712 = vunpack.c.l.b16 %v648
        %v713 = vunpack.c.l.b16 %v649
        %v714 = vunpack.c.l.b16 %v650
        %v715 = vunpack.c.l.b16 %v651
        %v716 = vunpack.c.l.b16 %v652
        %v717 = vunpack.c.l.b16 %v653
        %v718 = vunpack.c.l.b16 %v654
        %v719 = vunpack.c.l.b16 %v655
        %v720 = vunpack.c.l.b16 %v656
        %v721 = vunpack.c.l.b16 %v657
        %v722 = vunpack.c.l.b16 %v658
        %v723 = vunpack.c.l.b16 %v659
        %v724 = vunpack.c.l.b16 %v660
        %v725 = vunpack.c.l.b16 %v661
        %v726 = vunpack.c.l.b16 %v662
        %v727 = vunpack.c.l.b16 %v663
        %v728 = vunpack.c.l.b16 %v664
        %v729 = vunpack.c.l.b16 %v665
        %v730 = vunpack.c.l.b16 %v666
        %v731 = vunpack.c.l.b16 %v667
        %v732 = vunpack.c.l.b16 %v668
        %v733 = vunpack.c.l.b16 %v669
        %v734 = vpack.c.b16 %v703, %v702
        %v735 = vpack.c.b16 %v705, %v704
        %v736 = vpack.c.b16 %v707, %v706
        %v737 = vpack.c.b16 %v709, %v708
        %v738 = vpack.c.b16 %v711, %v710
        %v739 = vpack.c.b16 %v713, %v712
        %v740 = vpack.c.b16 %v715, %v714
        %v741 = vpack.c.b16 %v717, %v716
        %v742 = vpack.c.b16 %v719, %v718
        %v743 = vpack.c.b16 %v721, %v720
        %v744 = vpack.c.b16 %v723, %v722
        %v745 = vpack.c.b16 %v725, %v724
        %v746 = vpack.c.b16 %v727, %v726
        %v747 = vpack.c.b16 %v729, %v728
        %v748 = vpack.c.b16 %v731, %v730
        %v749 = vpack.c.b16 %v733, %v732
        %750 = vrot.lane.b32.xlu0 %v734, 64
        %v751 = vpop.permute.xlu0 %750
        %752 = vrot.lane.b32.xlu0 %v735, 64
        %v753 = vpop.permute.xlu0 %752
        %754 = vrot.lane.b32.xlu0 %v736, 64
        %v755 = vpop.permute.xlu0 %754
        %756 = vrot.lane.b32.xlu0 %v737, 64
        %v757 = vpop.permute.xlu0 %756
        %758 = vrot.lane.b32.xlu0 %v738, 64
        %v759 = vpop.permute.xlu0 %758
        %760 = vrot.lane.b32.xlu0 %v739, 64
        %v761 = vpop.permute.xlu0 %760
        %762 = vrot.lane.b32.xlu0 %v740, 64
        %v763 = vpop.permute.xlu0 %762
        %764 = vrot.lane.b32.xlu0 %v741, 64
        %v765 = vpop.permute.xlu0 %764
        %766 = vrot.lane.b32.xlu0 %v742, 64
        %v767 = vpop.permute.xlu0 %766
        %768 = vrot.lane.b32.xlu0 %v743, 64
        %v769 = vpop.permute.xlu0 %768
        %770 = vrot.lane.b32.xlu0 %v744, 64
        %v771 = vpop.permute.xlu0 %770
        %772 = vrot.lane.b32.xlu0 %v745, 64
        %v773 = vpop.permute.xlu0 %772
        %774 = vrot.lane.b32.xlu0 %v746, 64
        %v775 = vpop.permute.xlu0 %774
        %776 = vrot.lane.b32.xlu0 %v747, 64
        %v777 = vpop.permute.xlu0 %776
        %778 = vrot.lane.b32.xlu0 %v748, 64
        %v779 = vpop.permute.xlu0 %778
        %780 = vrot.lane.b32.xlu0 %v749, 64
        %v781 = vpop.permute.xlu0 %780
        %798 = vmatprep.subr.bf16.mxu0 0
        %799 = vmatpush1.bf16.msra.mxu0 %v751
        %800 = vmatprep.subr.bf16.mxu0 0
        %801 = vmatpush1.bf16.msra.mxu0 %v753
        %802 = vmatprep.subr.bf16.mxu0 0
        %803 = vmatpush1.bf16.msra.mxu0 %v755
        %804 = vmatprep.subr.bf16.mxu0 0
        %805 = vmatpush1.bf16.msra.mxu0 %v757
        %806 = vmatprep.subr.bf16.mxu0 0
        %807 = vmatpush1.bf16.msra.mxu0 %v759
        %808 = vmatprep.subr.bf16.mxu0 0
        %809 = vmatpush1.bf16.msra.mxu0 %v761
        %810 = vmatprep.subr.bf16.mxu0 0
        %811 = vmatpush1.bf16.msra.mxu0 %v763
        %812 = vmatprep.subr.bf16.mxu0 0
        %813 = vmatpush1.bf16.msra.mxu0 %v765
        %814 = vmatprep.subr.bf16.mxu0 0
        %815 = vmatpush1.bf16.msra.mxu0 %v767
        %816 = vmatprep.subr.bf16.mxu0 0
        %817 = vmatpush1.bf16.msra.mxu0 %v769
        %818 = vmatprep.subr.bf16.mxu0 0
        %819 = vmatpush1.bf16.msra.mxu0 %v771
        %820 = vmatprep.subr.bf16.mxu0 0
        %821 = vmatpush1.bf16.msra.mxu0 %v773
        %822 = vmatprep.subr.bf16.mxu0 0
        %823 = vmatpush1.bf16.msra.mxu0 %v775
        %824 = vmatprep.subr.bf16.mxu0 0
        %825 = vmatpush1.bf16.msra.mxu0 %v777
        %826 = vmatprep.subr.bf16.mxu0 0
        %827 = vmatpush1.bf16.msra.mxu0 %v779
        %828 = vmatprep.subr.bf16.mxu0 0
        %829 = vmatpush1.bf16.msra.mxu0 %v781
        %830 = vmatprep.mubr.bf16.mxu0 %v464
        %831 = vmatmul.mubr.bf16.gmra.mrb[0].mxu0 %v463
        %v832 = vpop.f32.mrb[0].mxu0
        %v833 = vadd.f32 0.0, %v832
        %v834 = vpop.f32.mrb[0].mxu0
        %v835 = vpop.f32.mrb[0].mxu0
        %v836 = vadd.f32 0.0, %v835
        %v837 = vpop.f32.mrb[0].mxu0
        %838 = vdwg.mxu0
        %v839 = vld [vmem:[%s307 + $0x1] sm:$0xff]
        %v840 = vld [vmem:[%s307 + $0x9] sm:$0xff]
        %v841 = vadd.f32 %v839, %v833
        %v842 = vadd.f32 %v840, %v836
        %843 = vst.msk [vmem:[%s307 + $0x1] sm:$0xff] %vm319, %v841
        %844 = vst.msk [vmem:[%s307 + $0x9] sm:$0xff] %vm319, %v842
        %v845 = vld [vmem:[%s226 + $0x4] sm:$0xf]
        %v846 = vld [vmem:[%s226 + $0xc] sm:$0xf]
        %v847 = vld [vmem:[%s226 + $0x14] sm:$0xf]
        %v848 = vld [vmem:[%s226 + $0x1c] sm:$0xf]
        %v849 = vld [vmem:[%s226 + $0x24] sm:$0xf]
        %v850 = vld [vmem:[%s226 + $0x2c] sm:$0xf]
        %v851 = vld [vmem:[%s226 + $0x34] sm:$0xf]
        %v852 = vld [vmem:[%s226 + $0x3c] sm:$0xf]
        %v853 = vld [vmem:[%s226 + $0x44] sm:$0xf]
        %v854 = vld [vmem:[%s226 + $0x4c] sm:$0xf]
        %v855 = vld [vmem:[%s226 + $0x54] sm:$0xf]
        %v856 = vld [vmem:[%s226 + $0x5c] sm:$0xf]
        %v857 = vld [vmem:[%s226 + $0x64] sm:$0xf]
        %v858 = vld [vmem:[%s226 + $0x6c] sm:$0xf]
        %v859 = vld [vmem:[%s226 + $0x74] sm:$0xf]
        %v860 = vld [vmem:[%s226 + $0x7c] sm:$0xf]
        %v861 = vld [vmem:[%s226 + $0x84] sm:$0xf]
        %v862 = vld [vmem:[%s226 + $0x8c] sm:$0xf]
        %v863 = vld [vmem:[%s226 + $0x94] sm:$0xf]
        %v864 = vld [vmem:[%s226 + $0x9c] sm:$0xf]
        %v865 = vld [vmem:[%s226 + $0xa4] sm:$0xf]
        %v866 = vld [vmem:[%s226 + $0xac] sm:$0xf]
        %v867 = vld [vmem:[%s226 + $0xb4] sm:$0xf]
        %v868 = vld [vmem:[%s226 + $0xbc] sm:$0xf]
        %v869 = vld [vmem:[%s226 + $0xc4] sm:$0xf]
        %v870 = vld [vmem:[%s226 + $0xcc] sm:$0xf]
        %v871 = vld [vmem:[%s226 + $0xd4] sm:$0xf]
        %v872 = vld [vmem:[%s226 + $0xdc] sm:$0xf]
        %v873 = vld [vmem:[%s226 + $0xe4] sm:$0xf]
        %v874 = vld [vmem:[%s226 + $0xec] sm:$0xf]
        %v875 = vld [vmem:[%s226 + $0xf4] sm:$0xf]
        %v876 = vld [vmem:[%s226 + $0xfc] sm:$0xf]
        %v909 = vunpack.c.l.b16 %v845
        %v910 = vunpack.c.l.b16 %v846
        %v911 = vunpack.c.l.b16 %v847
        %v912 = vunpack.c.l.b16 %v848
        %v913 = vunpack.c.l.b16 %v849
        %v914 = vunpack.c.l.b16 %v850
        %v915 = vunpack.c.l.b16 %v851
        %v916 = vunpack.c.l.b16 %v852
        %v917 = vunpack.c.l.b16 %v853
        %v918 = vunpack.c.l.b16 %v854
        %v919 = vunpack.c.l.b16 %v855
        %v920 = vunpack.c.l.b16 %v856
        %v921 = vunpack.c.l.b16 %v857
        %v922 = vunpack.c.l.b16 %v858
        %v923 = vunpack.c.l.b16 %v859
        %v924 = vunpack.c.l.b16 %v860
        %v925 = vunpack.c.l.b16 %v861
        %v926 = vunpack.c.l.b16 %v862
        %v927 = vunpack.c.l.b16 %v863
        %v928 = vunpack.c.l.b16 %v864
        %v929 = vunpack.c.l.b16 %v865
        %v930 = vunpack.c.l.b16 %v866
        %v931 = vunpack.c.l.b16 %v867
        %v932 = vunpack.c.l.b16 %v868
        %v933 = vunpack.c.l.b16 %v869
        %v934 = vunpack.c.l.b16 %v870
        %v935 = vunpack.c.l.b16 %v871
        %v936 = vunpack.c.l.b16 %v872
        %v937 = vunpack.c.l.b16 %v873
        %v938 = vunpack.c.l.b16 %v874
        %v939 = vunpack.c.l.b16 %v875
        %v940 = vunpack.c.l.b16 %v876
        %v941 = vpack.c.b16 %v910, %v909
        %v942 = vpack.c.b16 %v912, %v911
        %v943 = vpack.c.b16 %v914, %v913
        %v944 = vpack.c.b16 %v916, %v915
        %v945 = vpack.c.b16 %v918, %v917
        %v946 = vpack.c.b16 %v920, %v919
        %v947 = vpack.c.b16 %v922, %v921
        %v948 = vpack.c.b16 %v924, %v923
        %v949 = vpack.c.b16 %v926, %v925
        %v950 = vpack.c.b16 %v928, %v927
        %v951 = vpack.c.b16 %v930, %v929
        %v952 = vpack.c.b16 %v932, %v931
        %v953 = vpack.c.b16 %v934, %v933
        %v954 = vpack.c.b16 %v936, %v935
        %v955 = vpack.c.b16 %v938, %v937
        %v956 = vpack.c.b16 %v940, %v939
        %973 = vmatprep.subr.bf16.mxu0 0
        %974 = vmatpush1.bf16.msra.mxu0 %v941
        %975 = vmatprep.subr.bf16.mxu0 0
        %976 = vmatpush1.bf16.msra.mxu0 %v942
        %977 = vmatprep.subr.bf16.mxu0 0
        %978 = vmatpush1.bf16.msra.mxu0 %v943
        %979 = vmatprep.subr.bf16.mxu0 0
        %980 = vmatpush1.bf16.msra.mxu0 %v944
        %981 = vmatprep.subr.bf16.mxu0 0
        %982 = vmatpush1.bf16.msra.mxu0 %v945
        %983 = vmatprep.subr.bf16.mxu0 0
        %984 = vmatpush1.bf16.msra.mxu0 %v946
        %985 = vmatprep.subr.bf16.mxu0 0
        %986 = vmatpush1.bf16.msra.mxu0 %v947
        %987 = vmatprep.subr.bf16.mxu0 0
        %988 = vmatpush1.bf16.msra.mxu0 %v948
        %989 = vmatprep.subr.bf16.mxu0 0
        %990 = vmatpush1.bf16.msra.mxu0 %v949
        %991 = vmatprep.subr.bf16.mxu0 0
        %992 = vmatpush1.bf16.msra.mxu0 %v950
        %993 = vmatprep.subr.bf16.mxu0 0
        %994 = vmatpush1.bf16.msra.mxu0 %v951
        %995 = vmatprep.subr.bf16.mxu0 0
        %996 = vmatpush1.bf16.msra.mxu0 %v952
        %997 = vmatprep.subr.bf16.mxu0 0
        %998 = vmatpush1.bf16.msra.mxu0 %v953
        %999 = vmatprep.subr.bf16.mxu0 0
        %1000 = vmatpush1.bf16.msra.mxu0 %v954
        %1001 = vmatprep.subr.bf16.mxu0 0
        %1002 = vmatpush1.bf16.msra.mxu0 %v955
        %1003 = vmatprep.subr.bf16.mxu0 0
        %1004 = vmatpush1.bf16.msra.mxu0 %v956
        %1005 = vmatprep.mubr.bf16.mxu0 %v464
        %1006 = vmatmul.mubr.bf16.gmra.mrb[0].mxu0 %v463
        %v1007 = vpop.f32.mrb[0].mxu0
        %v1008 = vadd.f32 0.0, %v1007
        %v1009 = vpop.f32.mrb[0].mxu0
        %v1010 = vpop.f32.mrb[0].mxu0
        %v1011 = vadd.f32 0.0, %v1010
        %v1012 = vpop.f32.mrb[0].mxu0
        %1013 = vdwg.mxu0
        %v1014 = vld [vmem:[%s307 + $0x2] sm:$0xff]
        %v1015 = vld [vmem:[%s307 + $0xa] sm:$0xff]
        %v1016 = vadd.f32 %v1014, %v1008
        %v1017 = vadd.f32 %v1015, %v1011
        %1018 = vst.msk [vmem:[%s307 + $0x2] sm:$0xff] %vm319, %v1016
        %1019 = vst.msk [vmem:[%s307 + $0xa] sm:$0xff] %vm319, %v1017
        %v1020 = vld [vmem:[%s226 + $0x4] sm:$0xf]
        %v1021 = vld [vmem:[%s226 + $0xc] sm:$0xf]
        %v1022 = vld [vmem:[%s226 + $0x14] sm:$0xf]
        %v1023 = vld [vmem:[%s226 + $0x1c] sm:$0xf]
        %v1024 = vld [vmem:[%s226 + $0x24] sm:$0xf]
        %v1025 = vld [vmem:[%s226 + $0x2c] sm:$0xf]
        %v1026 = vld [vmem:[%s226 + $0x34] sm:$0xf]
        %v1027 = vld [vmem:[%s226 + $0x3c] sm:$0xf]
        %v1028 = vld [vmem:[%s226 + $0x44] sm:$0xf]
        %v1029 = vld [vmem:[%s226 + $0x4c] sm:$0xf]
        %v1030 = vld [vmem:[%s226 + $0x54] sm:$0xf]
        %v1031 = vld [vmem:[%s226 + $0x5c] sm:$0xf]
        %v1032 = vld [vmem:[%s226 + $0x64] sm:$0xf]
        %v1033 = vld [vmem:[%s226 + $0x6c] sm:$0xf]
        %v1034 = vld [vmem:[%s226 + $0x74] sm:$0xf]
        %v1035 = vld [vmem:[%s226 + $0x7c] sm:$0xf]
        %v1036 = vld [vmem:[%s226 + $0x84] sm:$0xf]
        %v1037 = vld [vmem:[%s226 + $0x8c] sm:$0xf]
        %v1038 = vld [vmem:[%s226 + $0x94] sm:$0xf]
        %v1039 = vld [vmem:[%s226 + $0x9c] sm:$0xf]
        %v1040 = vld [vmem:[%s226 + $0xa4] sm:$0xf]
        %v1041 = vld [vmem:[%s226 + $0xac] sm:$0xf]
        %v1042 = vld [vmem:[%s226 + $0xb4] sm:$0xf]
        %v1043 = vld [vmem:[%s226 + $0xbc] sm:$0xf]
        %v1044 = vld [vmem:[%s226 + $0xc4] sm:$0xf]
        %v1045 = vld [vmem:[%s226 + $0xcc] sm:$0xf]
        %v1046 = vld [vmem:[%s226 + $0xd4] sm:$0xf]
        %v1047 = vld [vmem:[%s226 + $0xdc] sm:$0xf]
        %v1048 = vld [vmem:[%s226 + $0xe4] sm:$0xf]
        %v1049 = vld [vmem:[%s226 + $0xec] sm:$0xf]
        %v1050 = vld [vmem:[%s226 + $0xf4] sm:$0xf]
        %v1051 = vld [vmem:[%s226 + $0xfc] sm:$0xf]
        %v1084 = vunpack.c.l.b16 %v1020
        %v1085 = vunpack.c.l.b16 %v1021
        %v1086 = vunpack.c.l.b16 %v1022
        %v1087 = vunpack.c.l.b16 %v1023
        %v1088 = vunpack.c.l.b16 %v1024
        %v1089 = vunpack.c.l.b16 %v1025
        %v1090 = vunpack.c.l.b16 %v1026
        %v1091 = vunpack.c.l.b16 %v1027
        %v1092 = vunpack.c.l.b16 %v1028
        %v1093 = vunpack.c.l.b16 %v1029
        %v1094 = vunpack.c.l.b16 %v1030
        %v1095 = vunpack.c.l.b16 %v1031
        %v1096 = vunpack.c.l.b16 %v1032
        %v1097 = vunpack.c.l.b16 %v1033
        %v1098 = vunpack.c.l.b16 %v1034
        %v1099 = vunpack.c.l.b16 %v1035
        %v1100 = vunpack.c.l.b16 %v1036
        %v1101 = vunpack.c.l.b16 %v1037
        %v1102 = vunpack.c.l.b16 %v1038
        %v1103 = vunpack.c.l.b16 %v1039
        %v1104 = vunpack.c.l.b16 %v1040
        %v1105 = vunpack.c.l.b16 %v1041
        %v1106 = vunpack.c.l.b16 %v1042
        %v1107 = vunpack.c.l.b16 %v1043
        %v1108 = vunpack.c.l.b16 %v1044
        %v1109 = vunpack.c.l.b16 %v1045
        %v1110 = vunpack.c.l.b16 %v1046
        %v1111 = vunpack.c.l.b16 %v1047
        %v1112 = vunpack.c.l.b16 %v1048
        %v1113 = vunpack.c.l.b16 %v1049
        %v1114 = vunpack.c.l.b16 %v1050
        %v1115 = vunpack.c.l.b16 %v1051
        %v1116 = vpack.c.b16 %v1085, %v1084
        %v1117 = vpack.c.b16 %v1087, %v1086
        %v1118 = vpack.c.b16 %v1089, %v1088
        %v1119 = vpack.c.b16 %v1091, %v1090
        %v1120 = vpack.c.b16 %v1093, %v1092
        %v1121 = vpack.c.b16 %v1095, %v1094
        %v1122 = vpack.c.b16 %v1097, %v1096
        %v1123 = vpack.c.b16 %v1099, %v1098
        %v1124 = vpack.c.b16 %v1101, %v1100
        %v1125 = vpack.c.b16 %v1103, %v1102
        %v1126 = vpack.c.b16 %v1105, %v1104
        %v1127 = vpack.c.b16 %v1107, %v1106
        %v1128 = vpack.c.b16 %v1109, %v1108
        %v1129 = vpack.c.b16 %v1111, %v1110
        %v1130 = vpack.c.b16 %v1113, %v1112
        %v1131 = vpack.c.b16 %v1115, %v1114
        %1132 = vrot.lane.b32.xlu0 %v1116, 64
        %v1133 = vpop.permute.xlu0 %1132
        %1134 = vrot.lane.b32.xlu0 %v1117, 64
        %v1135 = vpop.permute.xlu0 %1134
        %1136 = vrot.lane.b32.xlu0 %v1118, 64
        %v1137 = vpop.permute.xlu0 %1136
        %1138 = vrot.lane.b32.xlu0 %v1119, 64
        %v1139 = vpop.permute.xlu0 %1138
        %1140 = vrot.lane.b32.xlu0 %v1120, 64
        %v1141 = vpop.permute.xlu0 %1140
        %1142 = vrot.lane.b32.xlu0 %v1121, 64
        %v1143 = vpop.permute.xlu0 %1142
        %1144 = vrot.lane.b32.xlu0 %v1122, 64
        %v1145 = vpop.permute.xlu0 %1144
        %1146 = vrot.lane.b32.xlu0 %v1123, 64
        %v1147 = vpop.permute.xlu0 %1146
        %1148 = vrot.lane.b32.xlu0 %v1124, 64
        %v1149 = vpop.permute.xlu0 %1148
        %1150 = vrot.lane.b32.xlu0 %v1125, 64
        %v1151 = vpop.permute.xlu0 %1150
        %1152 = vrot.lane.b32.xlu0 %v1126, 64
        %v1153 = vpop.permute.xlu0 %1152
        %1154 = vrot.lane.b32.xlu0 %v1127, 64
        %v1155 = vpop.permute.xlu0 %1154
        %1156 = vrot.lane.b32.xlu0 %v1128, 64
        %v1157 = vpop.permute.xlu0 %1156
        %1158 = vrot.lane.b32.xlu0 %v1129, 64
        %v1159 = vpop.permute.xlu0 %1158
        %1160 = vrot.lane.b32.xlu0 %v1130, 64
        %v1161 = vpop.permute.xlu0 %1160
        %1162 = vrot.lane.b32.xlu0 %v1131, 64
        %v1163 = vpop.permute.xlu0 %1162
        %1180 = vmatprep.subr.bf16.mxu0 0
        %1181 = vmatpush1.bf16.msra.mxu0 %v1133
        %1182 = vmatprep.subr.bf16.mxu0 0
        %1183 = vmatpush1.bf16.msra.mxu0 %v1135
        %1184 = vmatprep.subr.bf16.mxu0 0
        %1185 = vmatpush1.bf16.msra.mxu0 %v1137
        %1186 = vmatprep.subr.bf16.mxu0 0
        %1187 = vmatpush1.bf16.msra.mxu0 %v1139
        %1188 = vmatprep.subr.bf16.mxu0 0
        %1189 = vmatpush1.bf16.msra.mxu0 %v1141
        %1190 = vmatprep.subr.bf16.mxu0 0
        %1191 = vmatpush1.bf16.msra.mxu0 %v1143
        %1192 = vmatprep.subr.bf16.mxu0 0
        %1193 = vmatpush1.bf16.msra.mxu0 %v1145
        %1194 = vmatprep.subr.bf16.mxu0 0
        %1195 = vmatpush1.bf16.msra.mxu0 %v1147
        %1196 = vmatprep.subr.bf16.mxu0 0
        %1197 = vmatpush1.bf16.msra.mxu0 %v1149
        %1198 = vmatprep.subr.bf16.mxu0 0
        %1199 = vmatpush1.bf16.msra.mxu0 %v1151
        %1200 = vmatprep.subr.bf16.mxu0 0
        %1201 = vmatpush1.bf16.msra.mxu0 %v1153
        %1202 = vmatprep.subr.bf16.mxu0 0
        %1203 = vmatpush1.bf16.msra.mxu0 %v1155
        %1204 = vmatprep.subr.bf16.mxu0 0
        %1205 = vmatpush1.bf16.msra.mxu0 %v1157
        %1206 = vmatprep.subr.bf16.mxu0 0
        %1207 = vmatpush1.bf16.msra.mxu0 %v1159
        %1208 = vmatprep.subr.bf16.mxu0 0
        %1209 = vmatpush1.bf16.msra.mxu0 %v1161
        %1210 = vmatprep.subr.bf16.mxu0 0
        %1211 = vmatpush1.bf16.msra.mxu0 %v1163
        %1212 = vmatprep.mubr.bf16.mxu0 %v464
        %1213 = vmatmul.mubr.bf16.gmra.mrb[0].mxu0 %v463
        %v1214 = vpop.f32.mrb[0].mxu0
        %v1215 = vadd.f32 0.0, %v1214
        %v1216 = vpop.f32.mrb[0].mxu0
        %v1217 = vpop.f32.mrb[0].mxu0
        %v1218 = vadd.f32 0.0, %v1217
        %v1219 = vpop.f32.mrb[0].mxu0
        %1220 = vdwg.mxu0
        %v1221 = vld [vmem:[%s307 + $0x3] sm:$0xff]
        %v1222 = vld [vmem:[%s307 + $0xb] sm:$0xff]
        %v1223 = vadd.f32 %v1221, %v1215
        %v1224 = vadd.f32 %v1222, %v1218
        %1225 = vst.msk [vmem:[%s307 + $0x3] sm:$0xff] %vm319, %v1223
        %1226 = vst.msk [vmem:[%s307 + $0xb] sm:$0xff] %vm319, %v1224
        %p1227 = scmp.lt.s32.totalorder %s28, 1
        %s1228 = scalar_select %p1227, %s28, 1
        %p1229 = scmp.lt.s32.totalorder %s29, 0
        %s1230 = scalar_select %p1229, %s29, 0
        %s1231 = smul.addr %s1230, 3
        %s1232 = smul.addr %s1228, 3
        %s1233 = sadd.s32 %s1231, %s1232
        %s1234 = smul.addr %s1233, 8
        %s1235 = scalar_lea.vmem %s4, %s1234
        // Predicated region
        $region37: #{tpu_custom_call.1} parent=31 // pred_check
          %p1236 = pneg %p140
        $region38: #{tpu_custom_call.1} parent=31 // pred_check_branch
          %1238 = sbr.rel (%p1236) target = $region40
        $region39: #{tpu_custom_call.1} parent=31 // pred_region
          _
        $region40: #{tpu_custom_call.1} parent=31 // pred_fallthru
          _
      $region32: #{tpu_custom_call.1} parent=5 // pred_fallthru
        _
      %p1239 = scmp.le.s32.totalorder 2, %s19
      // Predicated region
      $region41: #{tpu_custom_call.1} parent=5 // pred_check
        %p1240 = pneg %p1239
      $region42: #{tpu_custom_call.1} parent=5 // pred_check_branch
        %1242 = sbr.rel (%p1240) target = $region44
      $region43: #{tpu_custom_call.1} parent=5 // pred_region
        %s1243 = ssub.s32 %s19, 2
        // Predicated region
        $region45: #{tpu_custom_call.1} parent=43 // pred_check
          %p1244 = pneg %p146
        $region46: #{tpu_custom_call.1} parent=43 // pred_check_branch
          %1246 = sbr.rel (%p1244) target = $region48
        $region47: #{tpu_custom_call.1} parent=43 // pred_region
          %p1247 = scmp.lt.s32.totalorder %s30, 1
          %s1248 = scalar_select %p1247, %s30, 1
          %p1249 = scmp.lt.s32.totalorder %s31, 0
          %s1250 = scalar_select %p1249, %s31, 0
          %s1251 = smul.addr %s1250, 3
          %s1252 = smul.addr %s1248, 3
          %s1253 = sadd.s32 %s1251, %s1252
          %s1254 = smul.addr %s1253, 8
          %s1255 = scalar_lea.vmem %s4, %s1254
        $region48: #{tpu_custom_call.1} parent=43 // pred_fallthru
          _
      $region44: #{tpu_custom_call.1} parent=5 // pred_fallthru
        _
    $region6: #{tpu_custom_call.1} parent=1 // loop_footer
      %s23 = sadd.s32 1, %s19
    $region7: #{tpu_custom_call.1} parent=1 // loop_footer_branch
      %18 = sbr.rel target = $region3
    $region8: #{tpu_custom_call.1} parent=1 // loop_exit
      _
    %1256 = vsyncpa [#allocation6], 1
    %s1257 = scalar_lea.sflag [#allocation6], 1
    %1258 = vsyncpa %s1257, 1

</llo_original>
